<compile_context>
chip_gen: v6e
topology: v6e:2x2x1
jax: 0.10.0
libtpu: 0.0.40
codegen_flags: <defaults>
</compile_context>

<pallas_src>
import functools
import math

import jax
import jax.numpy as jnp
from jax.experimental import pallas as pl
from jax.experimental.pallas import tpu as pltpu


def _round_up(n, m):
    return ((n + m - 1) // m) * m


def _cdiv(a, b):
    return -(-a // b)


def _ebm_mlp_kernel(x_ref, w1t_ref, b1_ref, w2t_ref, b2_ref,
                    w3t_ref, b3_ref, we8_ref, be_ref, out_ref):
    """Fused MLP + energy head for one (TB, D) batch tile.

    Activations are carried transposed as (H, TB): H=32 on sublanes (dense),
    TB on lanes (dense) -> no lane-padding waste on bias/ReLU/casts.
    """
    # x tile arrives in f32 straight from HBM; cast to bf16 on the VPU right
    # before the MXU dot (cheap, hidden under the x DMA).
    x_bf = x_ref[...].astype(jnp.bfloat16)                        # (TB, D)

    # Layer 1: h1 = W1^T @ x^T via A·B^T (contract both last dims, the
    # flash-attention q@k^T pattern -- no TB-length layout transpose).
    h = jax.lax.dot_general(w1t_ref[...], x_bf,
                            dimension_numbers=(((1,), (1,)), ((), ())),
                            preferred_element_type=jnp.float32)   # (H, TB)
    h = jnp.maximum(h + b1_ref[...], 0.0)                         # f32 bias+ReLU

    # Extra layer 1: plain (H,H) @ (H,TB).
    h = jnp.dot(w2t_ref[...], h.astype(jnp.bfloat16),
                preferred_element_type=jnp.float32)
    h = jnp.maximum(h + b2_ref[...], 0.0)

    # Extra layer 2.
    h = jnp.dot(w3t_ref[...], h.astype(jnp.bfloat16),
                preferred_element_type=jnp.float32)
    h = jnp.maximum(h + b3_ref[...], 0.0)

    # Energy head: replicated (8, H) weight rows @ (H, TB) -> lane-dense
    # (8, TB); all 8 rows are identical, wrapper keeps row 0.  Avoids an N=1
    # MXU matmul and lane-sparse (TB, 1) masked stores.
    e8 = jnp.dot(we8_ref[...], h.astype(jnp.bfloat16),
                 preferred_element_type=jnp.float32)              # (8, TB)
    out_ref[0] = e8 + be_ref[...]                                 # (8, TB) store


def prepare_params(params):
    """One-time parameter preprocessing (transposes, bf16 casts, head layout).

    Hoisted out of the per-call path so each forward call only launches the
    Pallas kernel (plus a reshape of x)."""
    H = params["w1"].shape[1]
    return {
        "w1t": params["w1"].T.astype(jnp.bfloat16),                      # (H, D)
        "w2t": params["w2"].T.astype(jnp.bfloat16),                      # (H, H)
        "w3t": params["w3"].T.astype(jnp.bfloat16),                      # (H, H)
        "b1": params["b1"].reshape(H, 1).astype(jnp.float32),
        "b2": params["b2"].reshape(H, 1).astype(jnp.float32),
        "b3": params["b3"].reshape(H, 1).astype(jnp.float32),
        # energy weight (H,1) -> replicated (8,H) bf16 rows for the lane-dense head
        "we8": jnp.broadcast_to(params["we"].reshape(1, H), (8, H)).astype(jnp.bfloat16),
        "be": params["be"].reshape(1, 1).astype(jnp.float32),
    }


@functools.partial(jax.jit, static_argnames=("tile_b",))
def ebm_forward(x_nchw, prep, *, tile_b=4096):
    """Equivalent of F.forward(x): energy_output(f(x)).squeeze()."""
    B = x_nchw.shape[0]
    # NeuralNet.forward: x.reshape(-1, x.shape[-1]**2) for n_channels_in == 1
    x2d = x_nchw.reshape(B, -1).astype(jnp.float32)   # f32, no extra cast pass
    D = x2d.shape[1]
    H = prep["w1t"].shape[0]

    # Tiling: tiles are multiples of 128 rows (lane-dense output), at most
    # ~tile_b rows, and we force >=2 grid steps whenever B >= 256 so the
    # "parallel" axis can occupy both v7x TensorCores.  B is padded only as
    # far as the chosen tile requires (at most one extra 128-row group/tile).
    B128 = _round_up(B, 128)
    n128 = B128 // 128
    G = max(_cdiv(B128, tile_b), 2 if n128 >= 2 else 1)
    TB = 128 * _cdiv(n128, G)
    G = _cdiv(B128, TB)
    B_pad = G * TB
    if B_pad != B:
        x2d = jnp.pad(x2d, ((0, B_pad - B), (0, 0)))

    # Weights/biases: constant block index -> fetched once, VMEM-resident.
    const = lambda shape: pl.BlockSpec(shape, lambda i: (0, 0))

    # VMEM: double-buffered f32 x tile dominates; add headroom for the in-kernel
    # bf16 copy, the (H,TB)/(8,TB) intermediates, weights and output tiles.
    x_tile_bytes = TB * D * 4
    vmem_limit = min(32 << 20, max(8 << 20, 4 * x_tile_bytes + (2 << 20)))

    flops = 2 * B_pad * (D * H + 2 * H * H + 8 * H)
    bytes_accessed = (B_pad * D * 4                         # x in (f32)
                      + (D * H + 2 * H * H + 8 * H) * 2     # weights (bf16)
                      + (3 * H + 1) * 4                     # biases (f32)
                      + G * 8 * TB * 4)                     # energies out (f32)

    out = pl.pallas_call(
        _ebm_mlp_kernel,
        out_shape=jax.ShapeDtypeStruct((G, 8, TB), jnp.float32),
        grid=(G,),
        in_specs=[
            pl.BlockSpec((TB, D), lambda i: (i, 0)),        # x tile (pipelined, f32)
            const((H, D)), const((H, 1)),                   # w1^T, b1
            const((H, H)), const((H, 1)),                   # w2^T, b2
            const((H, H)), const((H, 1)),                   # w3^T, b3
            const((8, H)), const((1, 1)),                   # we (replicated rows), be
        ],
        out_specs=pl.BlockSpec((1, 8, TB), lambda i: (i, 0, 0)),
        compiler_params=pltpu.CompilerParams(
            dimension_semantics=("parallel",),
            vmem_limit_bytes=vmem_limit),
        cost_estimate=pl.CostEstimate(flops=flops, transcendentals=0,
                                      bytes_accessed=bytes_accessed),
    )(x2d, prep["w1t"], prep["b1"], prep["w2t"], prep["b2"],
      prep["w3t"], prep["b3"], prep["we8"], prep["be"])

    energy = out[:, 0, :].reshape(-1)[:B]   # keep row 0 per tile, drop padded rows
    return energy.squeeze()                 # torch .squeeze(): (1,) -> scalar
    # TODO(synk): classify()/class_output head not implemented (unused by forward()).


def init_params(key, input_size, hidden_size):
    """PyTorch nn.Linear default init: U(-1/sqrt(fan_in), 1/sqrt(fan_in))."""
    def linear(k, fan_in, fan_out):
        kw, kb = jax.random.split(k)
        bound = 1.0 / math.sqrt(fan_in)
        w = jax.random.uniform(kw, (fan_in, fan_out), jnp.float32, -bound, bound)
        b = jax.random.uniform(kb, (1, fan_out), jnp.float32, -bound, bound)
        return w, b

    k1, k2, k3, k4 = jax.random.split(key, 4)
    w1, b1 = linear(k1, input_size, hidden_size)
    w2, b2 = linear(k2, hidden_size, hidden_size)
    w3, b3 = linear(k3, hidden_size, hidden_size)
    we, be = linear(k4, hidden_size, 1)          # we: (H, 1), be: (1, 1)
    return {"w1": w1, "b1": b1, "w2": w2, "b2": b2,
            "w3": w3, "b3": b3, "we": we, "be": be}


def _ref_forward(x_nchw, params):
    """Pure-JAX reference mirroring the kernel's bf16/f32 mixed precision."""
    bf = lambda a: a.astype(jnp.bfloat16).astype(jnp.float32)
    x = bf(x_nchw.reshape(x_nchw.shape[0], -1))
    w1, w2, w3 = bf(params["w1"]), bf(params["w2"]), bf(params["w3"])
    we = bf(params["we"])
    h = jnp.maximum(jnp.dot(x, w1, precision="highest") + params["b1"], 0.0)
    h = jnp.maximum(jnp.dot(bf(h), w2, precision="highest") + params["b2"], 0.0)
    h = jnp.maximum(jnp.dot(bf(h), w3, precision="highest") + params["b3"], 0.0)
    e = jnp.dot(bf(h), we, precision="highest") + params["be"]
    return e.squeeze()


if __name__ == "__main__":
    key = jax.random.PRNGKey(0)
    kx, kp = jax.random.split(key)

    B, C, IM = 2, 1, 16                    # batch=2, n_ch=1, im_sz=16
    HIDDEN = 32                            # args.nn_hidden_size

    x = jax.random.normal(kx, (B, C, IM, IM), dtype=jnp.float32)   # NCHW input
    params = init_params(kp, IM * IM * C, HIDDEN)
    prep = prepare_params(params)          # one-time weight preprocessing

    energy = ebm_forward(x, prep)          # shape (B,)
    jax.block_until_ready(energy)

    ref = _ref_forward(x, params)
    assert energy.shape == (B,)
    assert jnp.allclose(energy, ref, atol=1e-3, rtol=1e-3)
    print("KERNEL_OK")
</pallas_src>

<mosaic_0001>
module attributes {stable_mosaic.version = 11 : i64} {
  func.func @_ebm_mlp_kernel(%arg0: i32, %arg1: memref<128x256xf32, #tpu.memory_space<vmem>>, %arg2: memref<32x256xbf16, #tpu.memory_space<vmem>>, %arg3: memref<32x1xf32, #tpu.memory_space<vmem>>, %arg4: memref<32x32xbf16, #tpu.memory_space<vmem>>, %arg5: memref<32x1xf32, #tpu.memory_space<vmem>>, %arg6: memref<32x32xbf16, #tpu.memory_space<vmem>>, %arg7: memref<32x1xf32, #tpu.memory_space<vmem>>, %arg8: memref<8x32xbf16, #tpu.memory_space<vmem>>, %arg9: memref<1x1xf32, #tpu.memory_space<vmem>>, %arg10: memref<1x8x128xf32, #tpu.memory_space<vmem>>) attributes {dimension_semantics = [#tpu.dimension_semantics<parallel>], iteration_bounds = array<i64: 1>, scalar_prefetch = 0 : i64, scratch_operands = 0 : i64, tpu.core_type = #tpu.core_type<tc>, window_params = [{transform_indices = @transform_0, window_bounds = array<i64: 128, 256>}, {pipeline_mode = #tpu.pipeline_mode<synchronous>, transform_indices = @transform_1, window_bounds = array<i64: 32, 256>}, {pipeline_mode = #tpu.pipeline_mode<synchronous>, transform_indices = @transform_2, window_bounds = array<i64: 32, 1>}, {pipeline_mode = #tpu.pipeline_mode<synchronous>, transform_indices = @transform_3, window_bounds = array<i64: 32, 32>}, {pipeline_mode = #tpu.pipeline_mode<synchronous>, transform_indices = @transform_4, window_bounds = array<i64: 32, 1>}, {pipeline_mode = #tpu.pipeline_mode<synchronous>, transform_indices = @transform_5, window_bounds = array<i64: 32, 32>}, {pipeline_mode = #tpu.pipeline_mode<synchronous>, transform_indices = @transform_6, window_bounds = array<i64: 32, 1>}, {pipeline_mode = #tpu.pipeline_mode<synchronous>, transform_indices = @transform_7, window_bounds = array<i64: 8, 32>}, {pipeline_mode = #tpu.pipeline_mode<synchronous>, transform_indices = @transform_8, window_bounds = array<i64: 1, 1>}, {transform_indices = @transform_9, window_bounds = array<i64: 1, 8, 128>}]} {
    %c0 = arith.constant 0 : index
    %c0_0 = arith.constant 0 : index
    %0 = vector.load %arg1[%c0, %c0_0] : memref<128x256xf32, #tpu.memory_space<vmem>>, vector<128x256xf32>
    %1 = arith.truncf %0 : vector<128x256xf32> to vector<128x256xbf16>
    %c0_1 = arith.constant 0 : index
    %c0_2 = arith.constant 0 : index
    %2 = vector.load %arg2[%c0_1, %c0_2] : memref<32x256xbf16, #tpu.memory_space<vmem>>, vector<32x256xbf16>
    %cst = arith.constant dense<0.000000e+00> : vector<32x128xf32>
    %3 = tpu.matmul %2, %1, %cst {dimension_numbers = #tpu.dot_dimension_numbers<[1], [1], [0], [0], [0, 0, 1, 0], [], []>} : vector<32x256xbf16>, vector<128x256xbf16>, vector<32x128xf32> -> vector<32x128xf32>
    %c0_3 = arith.constant 0 : index
    %c0_4 = arith.constant 0 : index
    %4 = vector.load %arg3[%c0_3, %c0_4] : memref<32x1xf32, #tpu.memory_space<vmem>>, vector<32x1xf32>
    %5 = vector.broadcast %4 : vector<32x1xf32> to vector<32x128xf32>
    %6 = arith.addf %3, %5 : vector<32x128xf32>
    %cst_5 = arith.constant 0.000000e+00 : f32
    %7 = vector.broadcast %cst_5 : f32 to vector<32x128xf32>
    %8 = arith.maximumf %6, %7 : vector<32x128xf32>
    %c0_6 = arith.constant 0 : index
    %c0_7 = arith.constant 0 : index
    %9 = vector.load %arg4[%c0_6, %c0_7] : memref<32x32xbf16, #tpu.memory_space<vmem>>, vector<32x32xbf16>
    %10 = arith.truncf %8 : vector<32x128xf32> to vector<32x128xbf16>
    %cst_8 = arith.constant dense<0.000000e+00> : vector<32x128xf32>
    %11 = tpu.matmul %9, %10, %cst_8 {dimension_numbers = #tpu.dot_dimension_numbers<[1], [0], [0], [1], [0, 0, 1, 1], [], []>} : vector<32x32xbf16>, vector<32x128xbf16>, vector<32x128xf32> -> vector<32x128xf32>
    %c0_9 = arith.constant 0 : index
    %c0_10 = arith.constant 0 : index
    %12 = vector.load %arg5[%c0_9, %c0_10] : memref<32x1xf32, #tpu.memory_space<vmem>>, vector<32x1xf32>
    %13 = vector.broadcast %12 : vector<32x1xf32> to vector<32x128xf32>
    %14 = arith.addf %11, %13 : vector<32x128xf32>
    %cst_11 = arith.constant 0.000000e+00 : f32
    %15 = vector.broadcast %cst_11 : f32 to vector<32x128xf32>
    %16 = arith.maximumf %14, %15 : vector<32x128xf32>
    %c0_12 = arith.constant 0 : index
    %c0_13 = arith.constant 0 : index
    %17 = vector.load %arg6[%c0_12, %c0_13] : memref<32x32xbf16, #tpu.memory_space<vmem>>, vector<32x32xbf16>
    %18 = arith.truncf %16 : vector<32x128xf32> to vector<32x128xbf16>
    %cst_14 = arith.constant dense<0.000000e+00> : vector<32x128xf32>
    %19 = tpu.matmul %17, %18, %cst_14 {dimension_numbers = #tpu.dot_dimension_numbers<[1], [0], [0], [1], [0, 0, 1, 1], [], []>} : vector<32x32xbf16>, vector<32x128xbf16>, vector<32x128xf32> -> vector<32x128xf32>
    %c0_15 = arith.constant 0 : index
    %c0_16 = arith.constant 0 : index
    %20 = vector.load %arg7[%c0_15, %c0_16] : memref<32x1xf32, #tpu.memory_space<vmem>>, vector<32x1xf32>
    %21 = vector.broadcast %20 : vector<32x1xf32> to vector<32x128xf32>
    %22 = arith.addf %19, %21 : vector<32x128xf32>
    %cst_17 = arith.constant 0.000000e+00 : f32
    %23 = vector.broadcast %cst_17 : f32 to vector<32x128xf32>
    %24 = arith.maximumf %22, %23 : vector<32x128xf32>
    %c0_18 = arith.constant 0 : index
    %c0_19 = arith.constant 0 : index
    %25 = vector.load %arg8[%c0_18, %c0_19] : memref<8x32xbf16, #tpu.memory_space<vmem>>, vector<8x32xbf16>
    %26 = arith.truncf %24 : vector<32x128xf32> to vector<32x128xbf16>
    %cst_20 = arith.constant dense<0.000000e+00> : vector<8x128xf32>
    %27 = tpu.matmul %25, %26, %cst_20 {dimension_numbers = #tpu.dot_dimension_numbers<[1], [0], [0], [1], [0, 0, 1, 1], [], []>} : vector<8x32xbf16>, vector<32x128xbf16>, vector<8x128xf32> -> vector<8x128xf32>
    %c0_21 = arith.constant 0 : index
    %c0_22 = arith.constant 0 : index
    %28 = vector.load %arg9[%c0_21, %c0_22] : memref<1x1xf32, #tpu.memory_space<vmem>>, vector<1x1xf32>
    %29 = vector.broadcast %28 : vector<1x1xf32> to vector<8x128xf32>
    %30 = arith.addf %27, %29 : vector<8x128xf32>
    %c0_23 = arith.constant 0 : index
    %c0_24 = arith.constant 0 : index
    %c0_25 = arith.constant 0 : index
    %31 = vector.load %arg10[%c0_23, %c0_24, %c0_25] : memref<1x8x128xf32, #tpu.memory_space<vmem>>, vector<1x8x128xf32>
    %32 = vector.shape_cast %31 : vector<1x8x128xf32> to vector<8x128xf32>
    %33 = vector.shape_cast %30 : vector<8x128xf32> to vector<1x8x128xf32>
    tpu.vector_store %arg10[%c0_23, %c0_24, %c0_25], %33 {strides = array<i32>} : memref<1x8x128xf32, #tpu.memory_space<vmem>>, vector<1x8x128xf32>,
    return
  }
  func.func @transform_0(%arg0: i32) -> (i32, i32) {
    %c0_i32 = arith.constant 0 : i32
    %c0_i32_0 = arith.constant 0 : i32
    return %arg0, %c0_i32 : i32, i32
  }
  func.func @transform_1(%arg0: i32) -> (i32, i32) {
    %c0_i32 = arith.constant 0 : i32
    %c0_i32_0 = arith.constant 0 : i32
    %c0_i32_1 = arith.constant 0 : i32
    return %c0_i32, %c0_i32_0 : i32, i32
  }
  func.func @transform_2(%arg0: i32) -> (i32, i32) {
    %c0_i32 = arith.constant 0 : i32
    %c0_i32_0 = arith.constant 0 : i32
    %c0_i32_1 = arith.constant 0 : i32
    return %c0_i32, %c0_i32_0 : i32, i32
  }
  func.func @transform_3(%arg0: i32) -> (i32, i32) {
    %c0_i32 = arith.constant 0 : i32
    %c0_i32_0 = arith.constant 0 : i32
    %c0_i32_1 = arith.constant 0 : i32
    return %c0_i32, %c0_i32_0 : i32, i32
  }
  func.func @transform_4(%arg0: i32) -> (i32, i32) {
    %c0_i32 = arith.constant 0 : i32
    %c0_i32_0 = arith.constant 0 : i32
    %c0_i32_1 = arith.constant 0 : i32
    return %c0_i32, %c0_i32_0 : i32, i32
  }
  func.func @transform_5(%arg0: i32) -> (i32, i32) {
    %c0_i32 = arith.constant 0 : i32
    %c0_i32_0 = arith.constant 0 : i32
    %c0_i32_1 = arith.constant 0 : i32
    return %c0_i32, %c0_i32_0 : i32, i32
  }
  func.func @transform_6(%arg0: i32) -> (i32, i32) {
    %c0_i32 = arith.constant 0 : i32
    %c0_i32_0 = arith.constant 0 : i32
    %c0_i32_1 = arith.constant 0 : i32
    return %c0_i32, %c0_i32_0 : i32, i32
  }
  func.func @transform_7(%arg0: i32) -> (i32, i32) {
    %c0_i32 = arith.constant 0 : i32
    %c0_i32_0 = arith.constant 0 : i32
    %c0_i32_1 = arith.constant 0 : i32
    return %c0_i32, %c0_i32_0 : i32, i32
  }
  func.func @transform_8(%arg0: i32) -> (i32, i32) {
    %c0_i32 = arith.constant 0 : i32
    %c0_i32_0 = arith.constant 0 : i32
    %c0_i32_1 = arith.constant 0 : i32
    return %c0_i32, %c0_i32_0 : i32, i32
  }
  func.func @transform_9(%arg0: i32) -> (i32, i32, i32) {
    %c0_i32 = arith.constant 0 : i32
    %c0_i32_0 = arith.constant 0 : i32
    %c0_i32_1 = arith.constant 0 : i32
    return %arg0, %c0_i32, %c0_i32_0 : i32, i32, i32
  }
}

</mosaic_0001>

<llo_original>
// kernel: ebm_forward.1
$region0: #{ebm_forward.1}
  #allocation0 [shape = 'u32[]', space=smem, size = 0x4, offset = 0x4, fixed_abs, tag = 'smem constant byte address 0x4 - core index']
  #allocation1 [shape = 'u32[144,128]{1,0:T(1,128)}', space=vmem, size = 0x12000, scoped, tag = 'internal scratch']
  #allocation2 [shape = 'f32[1,1]{1,0:T(1,128)S(1)}', space=vmem, size = 0x200, scoped, tag = 'scoped memory for ebm_forward.1']
  %s0 = inlined_call_operand.vmem [shape: f32[128,256], index: 0, kind: input, shape index: {}]
  %s1 = inlined_call_operand.vmem [shape: bf16[32,256], index: 1, kind: input, shape index: {}]
  %s2 = inlined_call_operand.vmem [shape: f32[32,1], index: 2, kind: input, shape index: {}]
  %s3 = inlined_call_operand.vmem [shape: bf16[32,32], index: 3, kind: input, shape index: {}]
  %s4 = inlined_call_operand.vmem [shape: f32[32,1], index: 4, kind: input, shape index: {}]
  %s5 = inlined_call_operand.vmem [shape: bf16[32,32], index: 5, kind: input, shape index: {}]
  %s6 = inlined_call_operand.vmem [shape: f32[32,1], index: 6, kind: input, shape index: {}]
  %s7 = inlined_call_operand.vmem [shape: bf16[8,32], index: 7, kind: input, shape index: {}]
  %s8 = inlined_call_operand.<no memory space> [shape: f32[1,1], index: 8, kind: input, shape index: {}]
  %s9 = inlined_call_operand.vmem [shape: f32[1,8,128], index: 9, kind: output, shape index: {}]
  %s10 = sld [smem:[#allocation0]]
  $region46: #{ebm_forward.1} parent=0
    _
  %s12 = ssub.s32 1, %s10
  %s13 = scalar_select 0, %s12, %s10
  %v14 = vstv %s8
  %15 = vst [vmem:[#allocation2] sm:$0x1] %v14
  // Predicated region
  $region2: #{ebm_forward.1} parent=0 // pred_check
    _
  $region3: #{ebm_forward.1} parent=0 // pred_check_branch
    %17 = sbr.rel (0) target = $region5
  $region4: #{ebm_forward.1} parent=0 // pred_region
    _
  $region5: #{ebm_forward.1} parent=0 // pred_fallthru
    _
  // Predicated region
  $region6: #{ebm_forward.1} parent=0 // pred_check
    _
  $region7: #{ebm_forward.1} parent=0 // pred_check_branch
    %19 = sbr.rel (0) target = $region9
  $region8: #{ebm_forward.1} parent=0 // pred_region
    _
  $region9: #{ebm_forward.1} parent=0 // pred_fallthru
    _
  // Predicated region
  $region10: #{ebm_forward.1} parent=0 // pred_check
    _
  $region11: #{ebm_forward.1} parent=0 // pred_check_branch
    %21 = sbr.rel (0) target = $region13
  $region12: #{ebm_forward.1} parent=0 // pred_region
    _
  $region13: #{ebm_forward.1} parent=0 // pred_fallthru
    _
  // Predicated region
  $region14: #{ebm_forward.1} parent=0 // pred_check
    _
  $region15: #{ebm_forward.1} parent=0 // pred_check_branch
    %23 = sbr.rel (0) target = $region17
  $region16: #{ebm_forward.1} parent=0 // pred_region
    _
  $region17: #{ebm_forward.1} parent=0 // pred_fallthru
    _
  // Predicated region
  $region18: #{ebm_forward.1} parent=0 // pred_check
    _
  $region19: #{ebm_forward.1} parent=0 // pred_check_branch
    %25 = sbr.rel (0) target = $region21
  $region20: #{ebm_forward.1} parent=0 // pred_region
    _
  $region21: #{ebm_forward.1} parent=0 // pred_fallthru
    _
  // Predicated region
  $region22: #{ebm_forward.1} parent=0 // pred_check
    _
  $region23: #{ebm_forward.1} parent=0 // pred_check_branch
    %27 = sbr.rel (0) target = $region25
  $region24: #{ebm_forward.1} parent=0 // pred_region
    _
  $region25: #{ebm_forward.1} parent=0 // pred_fallthru
    _
  // Predicated region
  $region26: #{ebm_forward.1} parent=0 // pred_check
    _
  $region27: #{ebm_forward.1} parent=0 // pred_check_branch
    %29 = sbr.rel (0) target = $region29
  $region28: #{ebm_forward.1} parent=0 // pred_region
    _
  $region29: #{ebm_forward.1} parent=0 // pred_fallthru
    _
  // Predicated region
  $region30: #{ebm_forward.1} parent=0 // pred_check
    _
  $region31: #{ebm_forward.1} parent=0 // pred_check_branch
    %31 = sbr.rel (0) target = $region33
  $region32: #{ebm_forward.1} parent=0 // pred_region
    _
  $region33: #{ebm_forward.1} parent=0 // pred_fallthru
    _
  // Predicated region
  $region34: #{ebm_forward.1} parent=0 // pred_check
    _
  $region35: #{ebm_forward.1} parent=0 // pred_check_branch
    %33 = sbr.rel (0) target = $region37
  $region36: #{ebm_forward.1} parent=0 // pred_region
    _
  $region37: #{ebm_forward.1} parent=0 // pred_fallthru
    _
  %v35 = vld [vmem:[%s0] sm:$0xff]
  %v36 = vld [vmem:[%s0 + $0x8] sm:$0xff]
  %v37 = vld [vmem:[%s0 + $0x10] sm:$0xff]
  %v38 = vld [vmem:[%s0 + $0x18] sm:$0xff]
  %v39 = vld [vmem:[%s0 + $0x20] sm:$0xff]
  %v40 = vld [vmem:[%s0 + $0x28] sm:$0xff]
  %v41 = vld [vmem:[%s0 + $0x30] sm:$0xff]
  %v42 = vld [vmem:[%s0 + $0x38] sm:$0xff]
  %v43 = vld [vmem:[%s0 + $0x40] sm:$0xff]
  %v44 = vld [vmem:[%s0 + $0x48] sm:$0xff]
  %v45 = vld [vmem:[%s0 + $0x50] sm:$0xff]
  %v46 = vld [vmem:[%s0 + $0x58] sm:$0xff]
  %v47 = vld [vmem:[%s0 + $0x60] sm:$0xff]
  %v48 = vld [vmem:[%s0 + $0x68] sm:$0xff]
  %v49 = vld [vmem:[%s0 + $0x70] sm:$0xff]
  %v50 = vld [vmem:[%s0 + $0x78] sm:$0xff]
  %v51 = vld [vmem:[%s0 + $0x80] sm:$0xff]
  %v52 = vld [vmem:[%s0 + $0x88] sm:$0xff]
  %v53 = vld [vmem:[%s0 + $0x90] sm:$0xff]
  %v54 = vld [vmem:[%s0 + $0x98] sm:$0xff]
  %v55 = vld [vmem:[%s0 + $0xa0] sm:$0xff]
  %v56 = vld [vmem:[%s0 + $0xa8] sm:$0xff]
  %v57 = vld [vmem:[%s0 + $0xb0] sm:$0xff]
  %v58 = vld [vmem:[%s0 + $0xb8] sm:$0xff]
  %v59 = vld [vmem:[%s0 + $0xc0] sm:$0xff]
  %v60 = vld [vmem:[%s0 + $0xc8] sm:$0xff]
  %v61 = vld [vmem:[%s0 + $0xd0] sm:$0xff]
  %v62 = vld [vmem:[%s0 + $0xd8] sm:$0xff]
  %v63 = vld [vmem:[%s0 + $0xe0] sm:$0xff]
  %v64 = vld [vmem:[%s0 + $0xe8] sm:$0xff]
  %v65 = vld [vmem:[%s0 + $0xf0] sm:$0xff]
  %v66 = vld [vmem:[%s0 + $0xf8] sm:$0xff]
  %v67 = vpack.c.bf16 %v37, %v35
  %v68 = vpack.c.bf16 %v38, %v36
  %v69 = vpack.c.bf16 %v41, %v39
  %v70 = vpack.c.bf16 %v42, %v40
  %v71 = vpack.c.bf16 %v45, %v43
  %v72 = vpack.c.bf16 %v46, %v44
  %v73 = vpack.c.bf16 %v49, %v47
  %v74 = vpack.c.bf16 %v50, %v48
  %v75 = vpack.c.bf16 %v53, %v51
  %v76 = vpack.c.bf16 %v54, %v52
  %v77 = vpack.c.bf16 %v57, %v55
  %v78 = vpack.c.bf16 %v58, %v56
  %v79 = vpack.c.bf16 %v61, %v59
  %v80 = vpack.c.bf16 %v62, %v60
  %v81 = vpack.c.bf16 %v65, %v63
  %v82 = vpack.c.bf16 %v66, %v64
  %v83 = vld [vmem:[%s1] sm:$0xff]
  %v84 = vld [vmem:[%s1 + $0x8] sm:$0xff]
  %v85 = vld [vmem:[%s1 + $0x10] sm:$0xff]
  %v86 = vld [vmem:[%s1 + $0x18] sm:$0xff]
  %v87 = vld [vmem:[%s2] sm:$0xff]
  %v88 = vld [vmem:[%s2 + $0x8] sm:$0xff]
  %v89 = vld [vmem:[%s2 + $0x10] sm:$0xff]
  %v90 = vld [vmem:[%s2 + $0x18] sm:$0xff]
  %92 = vset.pattern.permute.xlu0 0
  %93 = vperm.xlu0 %92, %v87
  %v94 = vpop.permute.xlu0 %93
  %97 = vset.pattern.permute.xlu0 0
  %98 = vperm.xlu0 %97, %v88
  %v99 = vpop.permute.xlu0 %98
  %102 = vset.pattern.permute.xlu0 0
  %103 = vperm.xlu0 %102, %v89
  %v104 = vpop.permute.xlu0 %103
  %107 = vset.pattern.permute.xlu0 0
  %108 = vperm.xlu0 %107, %v90
  %v109 = vpop.permute.xlu0 %108
  %v115 = vunpack.c.l.b16 %v83
  %v116 = vunpack.c.h.b16 %v83
  %v117 = vunpack.c.l.b16 %v84
  %v118 = vunpack.c.h.b16 %v84
  %v119 = vunpack.c.l.b16 %v85
  %v120 = vunpack.c.h.b16 %v85
  %v121 = vunpack.c.l.b16 %v86
  %v122 = vunpack.c.h.b16 %v86
  %v123 = vpack.c.b16 %v117, %v115
  %v124 = vpack.c.b16 %v118, %v116
  %v125 = vpack.c.b16 %v121, %v119
  %v126 = vpack.c.b16 %v122, %v120
  %131 = vmatprep.subr.bf16.mxu0 %v82
  %132 = vmatpush1.bf16.xpose.msra.mxu0 %v81
  %133 = vmatprep.subr.bf16.mxu0 %v80
  %134 = vmatpush1.bf16.xpose.msra.mxu0 %v79
  %135 = vmatprep.subr.bf16.mxu0 %v78
  %136 = vmatpush1.bf16.xpose.msra.mxu0 %v77
  %137 = vmatprep.subr.bf16.mxu0 %v76
  %138 = vmatpush1.bf16.xpose.msra.mxu0 %v75
  %139 = vmatprep.subr.bf16.mxu0 %v74
  %140 = vmatpush1.bf16.xpose.msra.mxu0 %v73
  %141 = vmatprep.subr.bf16.mxu0 %v72
  %142 = vmatpush1.bf16.xpose.msra.mxu0 %v71
  %143 = vmatprep.subr.bf16.mxu0 %v70
  %144 = vmatpush1.bf16.xpose.msra.mxu0 %v69
  %145 = vmatprep.subr.bf16.mxu0 %v68
  %146 = vmatpush1.bf16.xpose.msra.mxu0 %v67
  %147 = vmatprep.subr.bf16.mxu0 0
  %148 = vmatpush2.bf16.xpose.msra.mxu0 0
  %149 = vmatprep.subr.bf16.mxu0 0
  %150 = vmatpush2.bf16.xpose.msra.mxu0 0
  %151 = vmatprep.subr.bf16.mxu0 0
  %152 = vmatpush2.bf16.xpose.msra.mxu0 0
  %153 = vmatprep.subr.bf16.mxu0 0
  %154 = vmatpush2.bf16.xpose.msra.mxu0 0
  %155 = vmatprep.subr.bf16.mxu0 0
  %156 = vmatpush2.bf16.xpose.msra.mxu0 0
  %157 = vmatprep.subr.bf16.mxu0 0
  %158 = vmatpush2.bf16.xpose.msra.mxu0 0
  %159 = vmatprep.subr.bf16.mxu0 0
  %160 = vmatpush2.bf16.xpose.msra.mxu0 0
  %161 = vmatprep.subr.bf16.mxu0 0
  %162 = vmatpush2.bf16.xpose.msra.mxu0 0
  %163 = vmatprep.mubr.bf16.mxu0 %v124
  %164 = vmatmul.mubr.bf16.gmra.mxu0 %v123
  %v165 = vpop.f32.mrf.mxu0
  %v166 = vadd.f32 %v94, %v165
  %v167 = vpop.f32.mrf.mxu0
  %v168 = vpop.f32.mrf.mxu0
  %v169 = vadd.f32 %v99, %v168
  %v170 = vpop.f32.mrf.mxu0
  %171 = vmatprep.mubr.bf16.mxu0 %v126
  %172 = vmatmul.mubr.bf16.gmra.mxu0 %v125
  %v173 = vpop.f32.mrf.mxu0
  %v174 = vadd.f32 %v104, %v173
  %v175 = vpop.f32.mrf.mxu0
  %v176 = vpop.f32.mrf.mxu0
  %v177 = vadd.f32 %v109, %v176
  %v178 = vpop.f32.mrf.mxu0
  %179 = vdwg.mxu0
  %v180 = vmax.f32 %v166, 0.0
  %v181 = vmax.f32 %v169, 0.0
  %v182 = vmax.f32 %v174, 0.0
  %v183 = vmax.f32 %v177, 0.0
  %v184 = vld [vmem:[%s3] sm:$0xf]
  %v185 = vld [vmem:[%s3 + $0x4] sm:$0xf]
  %v186 = vld [vmem:[%s3 + $0x8] sm:$0xf]
  %v187 = vld [vmem:[%s3 + $0xc] sm:$0xf]
  %v188 = vpack.c.bf16 %v181, %v180
  %v189 = vpack.c.bf16 %v183, %v182
  %v190 = vld [vmem:[%s4] sm:$0xff]
  %v191 = vld [vmem:[%s4 + $0x8] sm:$0xff]
  %v192 = vld [vmem:[%s4 + $0x10] sm:$0xff]
  %v193 = vld [vmem:[%s4 + $0x18] sm:$0xff]
  %195 = vset.pattern.permute.xlu0 0
  %196 = vperm.xlu0 %195, %v190
  %v197 = vpop.permute.xlu0 %196
  %200 = vset.pattern.permute.xlu0 0
  %201 = vperm.xlu0 %200, %v191
  %v202 = vpop.permute.xlu0 %201
  %205 = vset.pattern.permute.xlu0 0
  %206 = vperm.xlu0 %205, %v192
  %v207 = vpop.permute.xlu0 %206
  %210 = vset.pattern.permute.xlu0 0
  %211 = vperm.xlu0 %210, %v193
  %v212 = vpop.permute.xlu0 %211
  %v218 = vunpack.c.l.b16 %v184
  %v219 = vunpack.c.l.b16 %v185
  %v220 = vunpack.c.l.b16 %v186
  %v221 = vunpack.c.l.b16 %v187
  %v222 = vpack.c.b16 %v219, %v218
  %v223 = vpack.c.b16 %v221, %v220
  %vm224 = vcmask 261120
  %v226 = vsel %vm224, %v222, 0
  %v229 = vsel %vm224, %v223, 0
  %231 = vmatprep.subr.bf16.mxu0 0
  %232 = vmatpush1.bf16.msra.mxu0 0
  %233 = vmatprep.subr.bf16.mxu0 0
  %234 = vmatpush1.bf16.msra.mxu0 0
  %235 = vmatprep.subr.bf16.mxu0 0
  %236 = vmatpush1.bf16.msra.mxu0 0
  %237 = vmatprep.subr.bf16.mxu0 0
  %238 = vmatpush1.bf16.msra.mxu0 0
  %239 = vmatprep.subr.bf16.mxu0 0
  %240 = vmatpush1.bf16.msra.mxu0 0
  %241 = vmatprep.subr.bf16.mxu0 0
  %242 = vmatpush1.bf16.msra.mxu0 0
  %243 = vmatprep.subr.bf16.mxu0 0
  %244 = vmatpush1.bf16.msra.mxu0 %v189
  %245 = vmatprep.subr.bf16.mxu0 0
  %246 = vmatpush1.bf16.msra.mxu0 %v188
  %247 = vmatprep.subr.bf16.mxu0 0
  %248 = vmatpush2.bf16.msra.mxu0 0
  %249 = vmatprep.subr.bf16.mxu0 0
  %250 = vmatpush2.bf16.msra.mxu0 0
  %251 = vmatprep.subr.bf16.mxu0 0
  %252 = vmatpush2.bf16.msra.mxu0 0
  %253 = vmatprep.subr.bf16.mxu0 0
  %254 = vmatpush2.bf16.msra.mxu0 0
  %255 = vmatprep.subr.bf16.mxu0 0
  %256 = vmatpush2.bf16.msra.mxu0 0
  %257 = vmatprep.subr.bf16.mxu0 0
  %258 = vmatpush2.bf16.msra.mxu0 0
  %259 = vmatprep.subr.bf16.mxu0 0
  %260 = vmatpush2.bf16.msra.mxu0 0
  %261 = vmatprep.subr.bf16.mxu0 0
  %262 = vmatpush2.bf16.msra.mxu0 0
  %263 = vmatprep.mubr.bf16.mxu0 0
  %264 = vmatmul.mubr.bf16.gmra.mxu0 %v226
  %v265 = vpop.f32.mrf.mxu0
  %v266 = vadd.f32 %v197, %v265
  %v267 = vpop.f32.mrf.mxu0
  %v268 = vpop.f32.mrf.mxu0
  %v269 = vadd.f32 %v202, %v268
  %v270 = vpop.f32.mrf.mxu0
  %271 = vmatprep.mubr.bf16.mxu0 0
  %272 = vmatmul.mubr.bf16.gmra.mxu0 %v229
  %v273 = vpop.f32.mrf.mxu0
  %v274 = vadd.f32 %v207, %v273
  %v275 = vpop.f32.mrf.mxu0
  %v276 = vpop.f32.mrf.mxu0
  %v277 = vadd.f32 %v212, %v276
  %v278 = vpop.f32.mrf.mxu0
  %279 = vdwg.mxu0
  %v280 = vmax.f32 %v266, 0.0
  %v281 = vmax.f32 %v269, 0.0
  %v282 = vmax.f32 %v274, 0.0
  %v283 = vmax.f32 %v277, 0.0
  %v284 = vld [vmem:[%s5] sm:$0xf]
  %v285 = vld [vmem:[%s5 + $0x4] sm:$0xf]
  %v286 = vld [vmem:[%s5 + $0x8] sm:$0xf]
  %v287 = vld [vmem:[%s5 + $0xc] sm:$0xf]
  %v288 = vpack.c.bf16 %v281, %v280
  %v289 = vpack.c.bf16 %v283, %v282
  %v290 = vld [vmem:[%s6] sm:$0xff]
  %v291 = vld [vmem:[%s6 + $0x8] sm:$0xff]
  %v292 = vld [vmem:[%s6 + $0x10] sm:$0xff]
  %v293 = vld [vmem:[%s6 + $0x18] sm:$0xff]
  %295 = vset.pattern.permute.xlu0 0
  %296 = vperm.xlu0 %295, %v290
  %v297 = vpop.permute.xlu0 %296
  %300 = vset.pattern.permute.xlu0 0
  %301 = vperm.xlu0 %300, %v291
  %v302 = vpop.permute.xlu0 %301
  %305 = vset.pattern.permute.xlu0 0
  %306 = vperm.xlu0 %305, %v292
  %v307 = vpop.permute.xlu0 %306
  %310 = vset.pattern.permute.xlu0 0
  %311 = vperm.xlu0 %310, %v293
  %v312 = vpop.permute.xlu0 %311
  %v318 = vunpack.c.l.b16 %v284
  %v319 = vunpack.c.l.b16 %v285
  %v320 = vunpack.c.l.b16 %v286
  %v321 = vunpack.c.l.b16 %v287
  %v322 = vpack.c.b16 %v319, %v318
  %v323 = vpack.c.b16 %v321, %v320
  %v325 = vsel %vm224, %v322, 0
  %v328 = vsel %vm224, %v323, 0
  %330 = vmatprep.subr.bf16.mxu0 0
  %331 = vmatpush1.bf16.msra.mxu0 0
  %332 = vmatprep.subr.bf16.mxu0 0
  %333 = vmatpush1.bf16.msra.mxu0 0
  %334 = vmatprep.subr.bf16.mxu0 0
  %335 = vmatpush1.bf16.msra.mxu0 0
  %336 = vmatprep.subr.bf16.mxu0 0
  %337 = vmatpush1.bf16.msra.mxu0 0
  %338 = vmatprep.subr.bf16.mxu0 0
  %339 = vmatpush1.bf16.msra.mxu0 0
  %340 = vmatprep.subr.bf16.mxu0 0
  %341 = vmatpush1.bf16.msra.mxu0 0
  %342 = vmatprep.subr.bf16.mxu0 0
  %343 = vmatpush1.bf16.msra.mxu0 %v289
  %344 = vmatprep.subr.bf16.mxu0 0
  %345 = vmatpush1.bf16.msra.mxu0 %v288
  %346 = vmatprep.subr.bf16.mxu0 0
  %347 = vmatpush2.bf16.msra.mxu0 0
  %348 = vmatprep.subr.bf16.mxu0 0
  %349 = vmatpush2.bf16.msra.mxu0 0
  %350 = vmatprep.subr.bf16.mxu0 0
  %351 = vmatpush2.bf16.msra.mxu0 0
  %352 = vmatprep.subr.bf16.mxu0 0
  %353 = vmatpush2.bf16.msra.mxu0 0
  %354 = vmatprep.subr.bf16.mxu0 0
  %355 = vmatpush2.bf16.msra.mxu0 0
  %356 = vmatprep.subr.bf16.mxu0 0
  %357 = vmatpush2.bf16.msra.mxu0 0
  %358 = vmatprep.subr.bf16.mxu0 0
  %359 = vmatpush2.bf16.msra.mxu0 0
  %360 = vmatprep.subr.bf16.mxu0 0
  %361 = vmatpush2.bf16.msra.mxu0 0
  %362 = vmatprep.mubr.bf16.mxu0 0
  %363 = vmatmul.mubr.bf16.gmra.mxu0 %v325
  %v364 = vpop.f32.mrf.mxu0
  %v365 = vadd.f32 %v297, %v364
  %v366 = vpop.f32.mrf.mxu0
  %v367 = vpop.f32.mrf.mxu0
  %v368 = vadd.f32 %v302, %v367
  %v369 = vpop.f32.mrf.mxu0
  %370 = vmatprep.mubr.bf16.mxu0 0
  %371 = vmatmul.mubr.bf16.gmra.mxu0 %v328
  %v372 = vpop.f32.mrf.mxu0
  %v373 = vadd.f32 %v307, %v372
  %v374 = vpop.f32.mrf.mxu0
  %v375 = vpop.f32.mrf.mxu0
  %v376 = vadd.f32 %v312, %v375
  %v377 = vpop.f32.mrf.mxu0
  %378 = vdwg.mxu0
  %v379 = vmax.f32 %v365, 0.0
  %v380 = vmax.f32 %v368, 0.0
  %v381 = vmax.f32 %v373, 0.0
  %v382 = vmax.f32 %v376, 0.0
  %v383 = vld [vmem:[%s7] sm:$0xf]
  %v384 = vpack.c.bf16 %v380, %v379
  %v385 = vpack.c.bf16 %v382, %v381
  %v386 = vld [vmem:[#allocation2] sm:$0x1]
  %v388 = vlaneseq
  %v389 = vshrl.u32 %v388, 7
  %v390 = vsub.s32 0, %v389
  %v391 = vrot.slane %v386, %v390
  %392 = vset.pattern.permute.xlu0 0
  %393 = vperm.xlu0 %392, %v391
  %v394 = vpop.permute.xlu0 %393
  %v397 = vsel %vm224, %v383, 0
  %399 = vmatprep.subr.bf16.mxu0 0
  %400 = vmatpush1.bf16.msra.mxu0 0
  %401 = vmatprep.subr.bf16.mxu0 0
  %402 = vmatpush1.bf16.msra.mxu0 0
  %403 = vmatprep.subr.bf16.mxu0 0
  %404 = vmatpush1.bf16.msra.mxu0 0
  %405 = vmatprep.subr.bf16.mxu0 0
  %406 = vmatpush1.bf16.msra.mxu0 0
  %407 = vmatprep.subr.bf16.mxu0 0
  %408 = vmatpush1.bf16.msra.mxu0 0
  %409 = vmatprep.subr.bf16.mxu0 0
  %410 = vmatpush1.bf16.msra.mxu0 0
  %411 = vmatprep.subr.bf16.mxu0 0
  %412 = vmatpush1.bf16.msra.mxu0 %v385
  %413 = vmatprep.subr.bf16.mxu0 0
  %414 = vmatpush1.bf16.msra.mxu0 %v384
  %415 = vmatprep.subr.bf16.mxu0 0
  %416 = vmatpush2.bf16.msra.mxu0 0
  %417 = vmatprep.subr.bf16.mxu0 0
  %418 = vmatpush2.bf16.msra.mxu0 0
  %419 = vmatprep.subr.bf16.mxu0 0
  %420 = vmatpush2.bf16.msra.mxu0 0
  %421 = vmatprep.subr.bf16.mxu0 0
  %422 = vmatpush2.bf16.msra.mxu0 0
  %423 = vmatprep.subr.bf16.mxu0 0
  %424 = vmatpush2.bf16.msra.mxu0 0
  %425 = vmatprep.subr.bf16.mxu0 0
  %426 = vmatpush2.bf16.msra.mxu0 0
  %427 = vmatprep.subr.bf16.mxu0 0
  %428 = vmatpush2.bf16.msra.mxu0 0
  %429 = vmatprep.subr.bf16.mxu0 0
  %430 = vmatpush2.bf16.msra.mxu0 0
  %431 = vmatprep.mubr.bf16.mxu0 0
  %432 = vmatmul.mubr.bf16.gmra.mxu0 %v397
  %v433 = vpop.f32.mrf.mxu0
  %v434 = vadd.f32 %v394, %v433
  %v435 = vpop.f32.mrf.mxu0
  %v436 = vpop.f32.mrf.mxu0
  %v437 = vpop.f32.mrf.mxu0
  %438 = vdwg.mxu0
  %439 = vst [vmem:[%s9] sm:$0xff] %v434
  // Predicated region
  $region38: #{ebm_forward.1} parent=0 // pred_check
    _
  $region39: #{ebm_forward.1} parent=0 // pred_check_branch
    %441 = sbr.rel (0) target = $region41
  $region40: #{ebm_forward.1} parent=0 // pred_region
    _
  $region41: #{ebm_forward.1} parent=0 // pred_fallthru
    _
  // Predicated region
  $region42: #{ebm_forward.1} parent=0 // pred_check
    _
  $region43: #{ebm_forward.1} parent=0 // pred_check_branch
    %443 = sbr.rel (0) target = $region45
  $region44: #{ebm_forward.1} parent=0 // pred_region
    _
  $region45: #{ebm_forward.1} parent=0 // pred_fallthru
    _

</llo_original>
